<compile_context>
chip_gen: v6e
topology: v6e:2x2x1
jax: 0.10.0
libtpu: 0.0.40
codegen_flags: <defaults>
</compile_context>

<pallas_src>
import random

import numpy as np

import jax
import jax.numpy as jnp
from jax.experimental import pallas as pl
from jax.experimental.pallas import tpu as pltpu


_MAX_IMAGES_PER_BLOCK = 16   # per-image matmuls are unrolled inside the kernel


# ----------------------------------------------------------------------------
# host-side (numpy) helpers: nearest indices, gaussian taps, transform matrices
# ----------------------------------------------------------------------------
def _gaussian_taps(ksize: int, sigma: float) -> np.ndarray:
    # matches kornia.filters.get_gaussian_kernel1d
    x = np.arange(ksize, dtype=np.float64) - ksize // 2
    if ksize % 2 == 0:
        x = x + 0.5
    g = np.exp(-(x * x) / (2.0 * sigma * sigma))
    return g / g.sum()


def _nearest_idx(in_size: int, out_size: int) -> np.ndarray:
    # matches F.interpolate(..., mode='nearest'): src = floor(dst * in / out)
    idx = np.floor(np.arange(out_size) * (in_size / out_size)).astype(np.int64)
    return np.minimum(idx, in_size - 1)


def _reflect_index(q: int, size: int) -> int:
    # torch-style 'reflect' (no edge repeat)
    if q < 0:
        return -q
    if q >= size:
        return 2 * size - 2 - q
    return q


def _pick_matrix(src_idx: np.ndarray, in_size: int) -> np.ndarray:
    """(out, in) 0/1 matrix implementing out[i] = x[src_idx[i]]."""
    m = np.zeros((len(src_idx), in_size), dtype=np.float64)
    m[np.arange(len(src_idx)), src_idx] = 1.0
    return m


def _blur_matrix(size: int, ksize: int, sigma: float) -> np.ndarray:
    """(size, size) banded matrix = 1-D gaussian blur with reflect padding."""
    g = _gaussian_taps(ksize, float(sigma))
    pad = ksize // 2
    m = np.zeros((size, size), dtype=np.float64)
    for i in range(size):
        for t in range(ksize):
            m[i, _reflect_index(i + t - pad, size)] += g[t]
    return m


# ----------------------------------------------------------------------------
# generation-aware VMEM budget and image-tile selection
# ----------------------------------------------------------------------------
def _vmem_budget_bytes():
    """(per-block budget, scoped vmem limit) derived from the actual chip."""
    try:
        cap = int(pltpu.get_tpu_info().vmem_capacity_bytes)
    except Exception:
        cap = 64 << 20                       # conservative fallback (v7x size)
    block_budget = min(cap // 4, 32 << 20)   # double-buffered in+out blocks
    vmem_limit = min(cap // 2, 48 << 20)     # scoped limit handed to Mosaic
    return block_budget, vmem_limit


def _choose_image_tile(n, bytes_per_image, mat_bytes, budget):
    """Largest divisor of n (<= cap) whose double-buffered block fits the
    budget, preferring >= 2 grid steps so both v7x TensorCores get work."""
    divisors = [d for d in range(min(n, _MAX_IMAGES_PER_BLOCK), 0, -1)
                if n % d == 0]

    def fits(nt):
        return 2 * nt * bytes_per_image + 2 * mat_bytes <= budget

    for nt in divisors:                      # prefer a multi-step grid
        if fits(nt) and (n // nt >= 2 or n == 1):
            return nt
    for nt in divisors:                      # otherwise the largest that fits
        if fits(nt):
            return nt
    return 1


# ----------------------------------------------------------------------------
# Pallas kernel: per-image separable linear stages on the MXU
# ----------------------------------------------------------------------------
def _make_fused_kernel(nt, stage_clips):
    n_stages = len(stage_clips)

    def kernel(*refs):
        x_ref = refs[0]
        mat_refs = refs[1:1 + 2 * n_stages]
        o_ref = refs[1 + 2 * n_stages]
        mats = [m[...] for m in mat_refs]            # small f32 operands, VMEM
        for i in range(nt):                          # unrolled (nt <= 16)
            y = x_ref[i].astype(jnp.float32)         # (H, W): W on lane axis
            for s in range(n_stages):
                y = jnp.dot(mats[2 * s], y,
                            preferred_element_type=jnp.float32)
                y = jnp.dot(y, mats[2 * s + 1],
                            preferred_element_type=jnp.float32)
                if stage_clips[s] is not None:
                    lo, hi = stage_clips[s]
                    y = jnp.clip(y, lo, hi)
            o_ref[i] = y.astype(o_ref.dtype)

    return kernel


def fused_resize_blur_resize(x, stage_mats, stage_clips):
    """Apply per-image separable linear stages: y <- R_s @ y @ C_s^T (+clamp).

    x: (B, C, H, W).  stage_mats: [(row_mat, col_mat), ...] (numpy float64),
    stage_clips: per-stage optional (lo, hi).  Returns (B, C, R_out, C_out).
    """
    b, c, h, w = x.shape
    n = b * c
    r_out = int(stage_mats[-1][0].shape[0])
    c_out = int(stage_mats[-1][1].shape[0])

    itemsize = jnp.dtype(x.dtype).itemsize
    bytes_per_image = (h * w + r_out * c_out) * itemsize
    mat_bytes = sum(m.size for rm, cm in stage_mats for m in (rm, cm)) * 4
    block_budget, vmem_limit = _vmem_budget_bytes()
    nt = _choose_image_tile(n, bytes_per_image, mat_bytes, block_budget)

    in_specs = [pl.BlockSpec((nt, h, w), lambda i: (i, 0, 0))]
    mat_args = []
    for row_mat, col_mat in stage_mats:
        rm = jnp.asarray(row_mat, dtype=jnp.float32)
        cmT = jnp.asarray(np.ascontiguousarray(col_mat.T), dtype=jnp.float32)
        mat_args += [rm, cmT]
        in_specs += [pl.BlockSpec(rm.shape, lambda i: (0, 0)),
                     pl.BlockSpec(cmT.shape, lambda i: (0, 0))]

    out = pl.pallas_call(
        _make_fused_kernel(nt, tuple(stage_clips)),
        out_shape=jax.ShapeDtypeStruct((n, r_out, c_out), x.dtype),
        grid=(n // nt,),
        in_specs=in_specs,
        out_specs=pl.BlockSpec((nt, r_out, c_out), lambda i: (i, 0, 0)),
        compiler_params=pltpu.CompilerParams(
            dimension_semantics=("parallel",),
            vmem_limit_bytes=vmem_limit,
        ),
    )(x.reshape(n, h, w), *mat_args)
    return out.reshape(b, c, r_out, c_out)


# ----------------------------------------------------------------------------
# LowresConditioner (Pallas version)
# ----------------------------------------------------------------------------
class LowresConditionerPallas:
    def __init__(self, downsample_first=True, use_blur=True, blur_prob=0.5,
                 blur_sigma=0.6, blur_kernel_size=3, use_noise=False,
                 input_image_range=None, normalize_img_fn=None,
                 unnormalize_img_fn=None):
        self.downsample_first = downsample_first
        self.input_image_range = input_image_range
        self.use_blur = use_blur
        self.blur_prob = blur_prob
        self.blur_sigma = blur_sigma
        self.blur_kernel_size = blur_kernel_size
        self.use_noise = use_noise
        self.normalize_img = normalize_img_fn or (lambda t: t)
        self.unnormalize_img = unnormalize_img_fn or (lambda t: t)
        # TODO(synk): use_noise=True path (NoiseScheduler.q_sample + random
        # noise levels) is not ported; the default use_noise=False is covered.

    def __call__(self, cond_fmap, *, target_image_size,
                 downsample_image_size=None, should_blur=True,
                 blur_sigma=None, blur_kernel_size=None):
        _, _, h, w = cond_fmap.shape
        clamp = self.input_image_range

        # 1) optional nearest downsample (reference keys its no-op check on
        #    the last spatial dim, like resize_image_to)
        do_down = (self.downsample_first and downsample_image_size is not None
                   and int(downsample_image_size) != w)
        h1 = int(downsample_image_size) if do_down else h
        w1 = int(downsample_image_size) if do_down else w

        # 2) blur gate: host-side python RNG, same draw order as the reference.
        #    NOTE: under jax.jit the gate and the sigma/ksize draws are frozen
        #    into the trace (the eager PyTorch reference re-samples per call).
        do_blur = bool(self.use_blur and should_blur
                       and (random.random() < self.blur_prob))
        sigma = ksize = None
        if do_blur:
            sigma = blur_sigma if blur_sigma is not None else self.blur_sigma
            ksize = blur_kernel_size if blur_kernel_size is not None \
                else self.blur_kernel_size
            if isinstance(sigma, tuple):
                sigma = random.uniform(*map(float, sigma))
            if isinstance(ksize, tuple):
                lo, hi = map(int, ksize)
                ksize = random.randrange(lo, hi + 1)
            sigma, ksize = float(sigma), int(ksize)
            assert ksize % 2 == 1, "only odd blur kernel sizes are supported"
            assert min(h1, w1) > ksize // 2, "reflect pad needs dim > pad"

        # 3) final nearest resize to target_image_size
        do_final = int(target_image_size) != w1
        h2 = int(target_image_size) if do_final else h1
        w2 = int(target_image_size) if do_final else w1

        if not (do_down or do_blur or do_final):
            return cond_fmap, None

        # host-side (float64) per-axis transform matrices
        def pick(in_size, out_size):
            return _pick_matrix(_nearest_idx(in_size, out_size), in_size)

        d_row = pick(h, h1) if do_down else np.eye(h)
        d_col = pick(w, w1) if do_down else np.eye(w)
        if do_blur:
            b_row = _blur_matrix(h1, ksize, sigma)
            b_col = _blur_matrix(w1, ksize, sigma)
        else:
            b_row, b_col = np.eye(h1), np.eye(w1)
        u_row = pick(h1, h2) if do_final else np.eye(h1)
        u_col = pick(w1, w2) if do_final else np.eye(w1)

        mid_clamp = clamp if (clamp is not None and do_down) else None
        end_clamp = clamp if (clamp is not None and do_final) else None

        if mid_clamp is not None:
            # clamp after the downsample breaks linearity -> two matmul stages
            stage_mats = [(d_row, d_col), (u_row @ b_row, u_col @ b_col)]
            stage_clips = [tuple(map(float, mid_clamp)),
                           tuple(map(float, end_clamp)) if end_clamp else None]
        else:
            stage_mats = [(u_row @ b_row @ d_row, u_col @ b_col @ d_col)]
            stage_clips = [tuple(map(float, end_clamp)) if end_clamp else None]

        out = fused_resize_blur_resize(cond_fmap, stage_mats, stage_clips)
        return out, None


# ----------------------------------------------------------------------------
# pure-JAX reference (independent check: gathers + direct 2-D reflect conv)
# ----------------------------------------------------------------------------
def _ref_resize_nearest(x, size, clamp_range=None):
    _, _, h, w = x.shape
    if w == size:
        return x
    ri = jnp.asarray(_nearest_idx(h, size), jnp.int32)
    ci = jnp.asarray(_nearest_idx(w, size), jnp.int32)
    out = jnp.take(jnp.take(x, ri, axis=2), ci, axis=3)
    if clamp_range is not None:
        out = jnp.clip(out, clamp_range[0], clamp_range[1])
    return out


def _ref_blur(x, ksize, sigma):
    b, c, h, w = x.shape
    pad = ksize // 2
    g = _gaussian_taps(ksize, sigma)
    k2 = np.outer(g, g)
    xp = jnp.pad(x, ((0, 0), (0, 0), (pad, pad), (pad, pad)), mode="reflect")
    acc = jnp.zeros((b, c, h, w), jnp.float32)
    for i in range(ksize):
        for j in range(ksize):
            acc = acc + float(k2[i, j]) * xp[:, :, i:i + h, j:j + w].astype(jnp.float32)
    return acc.astype(x.dtype)


def _ref_forward(x, target, ds=None, do_blur=True, ksize=3, sigma=0.6,
                 clamp_range=None):
    y = x
    if ds is not None:
        y = _ref_resize_nearest(y, ds, clamp_range)
    if do_blur:
        y = _ref_blur(y, ksize, sigma)
    return _ref_resize_nearest(y, target, clamp_range)


# ----------------------------------------------------------------------------
if __name__ == "__main__":
    random.seed(0)
    key = jax.random.PRNGKey(0)
    k1, k2 = jax.random.split(key)

    # case 1: canonical forward (downsample 16->8, blur k=3, resize -> 16)
    B, C, H = 2, 4, 16
    x1 = jax.random.normal(k1, (B, C, H, H), dtype=jnp.float32)
    cond = LowresConditionerPallas(downsample_first=True, use_blur=True,
                                   blur_prob=1.0, blur_sigma=0.6,
                                   blur_kernel_size=3, use_noise=False)
    out1, noise_levels = cond(x1, target_image_size=16,
                              downsample_image_size=8, should_blur=True)
    out1 = jax.block_until_ready(out1)
    assert out1.shape == (B, C, 16, 16), out1.shape
    assert noise_levels is None
    ref1 = jax.block_until_ready(_ref_forward(x1, 16, ds=8, do_blur=True,
                                              ksize=3, sigma=0.6))
    err1 = float(jnp.max(jnp.abs(out1 - ref1)))
    assert err1 < 2e-3, f"case1 max err {err1}"

    # same forward under jit (blur gate / sigma frozen at trace time)
    out1_jit = jax.block_until_ready(
        jax.jit(lambda im: cond(im, target_image_size=16,
                                downsample_image_size=8,
                                should_blur=True)[0])(x1))
    errj = float(jnp.max(jnp.abs(out1_jit - ref1)))
    assert errj < 2e-3, f"jit max err {errj}"

    # case 2: larger N (multi-step parallel grid), k=5 blur, input_image_range
    B2, C2, H2 = 2, 16, 32
    x2 = jax.random.normal(k2, (B2, C2, H2, H2), dtype=jnp.float32)
    cond2 = LowresConditionerPallas(downsample_first=True, use_blur=True,
                                    blur_prob=1.0, blur_sigma=1.0,
                                    blur_kernel_size=5, use_noise=False,
                                    input_image_range=(-1.0, 1.0))
    out2, _ = cond2(x2, target_image_size=32, downsample_image_size=16,
                    should_blur=True)
    out2 = jax.block_until_ready(out2)
    ref2 = jax.block_until_ready(_ref_forward(x2, 32, ds=16, do_blur=True,
                                              ksize=5, sigma=1.0,
                                              clamp_range=(-1.0, 1.0)))
    err2 = float(jnp.max(jnp.abs(out2 - ref2)))
    assert err2 < 2e-3, f"case2 max err {err2}"

    # case 3: no-blur path (blur_prob=0) -> fused nearest resize only
    cond3 = LowresConditionerPallas(use_blur=True, blur_prob=0.0)
    out3, _ = cond3(x1, target_image_size=8, downsample_image_size=None,
                    should_blur=True)
    out3 = jax.block_until_ready(out3)
    ref3 = jax.block_until_ready(_ref_resize_nearest(x1, 8))
    err3 = float(jnp.max(jnp.abs(out3 - ref3)))
    assert err3 < 2e-3, f"case3 max err {err3}"

    print("KERNEL_OK")
</pallas_src>

<mosaic_0001>
module attributes {stable_mosaic.version = 11 : i64} {
  func.func @kernel(%arg0: i32, %arg1: memref<4x16x16xf32, #tpu.memory_space<vmem>>, %arg2: memref<16x16xf32, #tpu.memory_space<vmem>>, %arg3: memref<16x16xf32, #tpu.memory_space<vmem>>, %arg4: memref<4x16x16xf32, #tpu.memory_space<vmem>>) attributes {dimension_semantics = [#tpu.dimension_semantics<parallel>], iteration_bounds = array<i64: 2>, scalar_prefetch = 0 : i64, scratch_operands = 0 : i64, tpu.core_type = #tpu.core_type<tc>, window_params = [{transform_indices = @transform_0, window_bounds = array<i64: 4, 16, 16>}, {pipeline_mode = #tpu.pipeline_mode<synchronous>, transform_indices = @transform_1, window_bounds = array<i64: 16, 16>}, {pipeline_mode = #tpu.pipeline_mode<synchronous>, transform_indices = @transform_2, window_bounds = array<i64: 16, 16>}, {transform_indices = @transform_3, window_bounds = array<i64: 4, 16, 16>}]} {
    %c0 = arith.constant 0 : index
    %c0_0 = arith.constant 0 : index
    %0 = vector.load %arg2[%c0, %c0_0] : memref<16x16xf32, #tpu.memory_space<vmem>>, vector<16x16xf32>
    %c0_1 = arith.constant 0 : index
    %c0_2 = arith.constant 0 : index
    %1 = vector.load %arg3[%c0_1, %c0_2] : memref<16x16xf32, #tpu.memory_space<vmem>>, vector<16x16xf32>
    %c0_3 = arith.constant 0 : index
    %c0_4 = arith.constant 0 : index
    %c0_5 = arith.constant 0 : index
    %2 = vector.load %arg1[%c0_3, %c0_4, %c0_5] : memref<4x16x16xf32, #tpu.memory_space<vmem>>, vector<1x16x16xf32>
    %3 = vector.shape_cast %2 : vector<1x16x16xf32> to vector<16x16xf32>
    %cst = arith.constant dense<0.000000e+00> : vector<16x16xf32>
    %4 = tpu.matmul %0, %3, %cst {dimension_numbers = #tpu.dot_dimension_numbers<[1], [0], [0], [1], [0, 0, 1, 1], [], []>} : vector<16x16xf32>, vector<16x16xf32>, vector<16x16xf32> -> vector<16x16xf32>
    %cst_6 = arith.constant dense<0.000000e+00> : vector<16x16xf32>
    %5 = tpu.matmul %4, %1, %cst_6 {dimension_numbers = #tpu.dot_dimension_numbers<[1], [0], [0], [1], [0, 0, 1, 1], [], []>} : vector<16x16xf32>, vector<16x16xf32>, vector<16x16xf32> -> vector<16x16xf32>
    %c0_7 = arith.constant 0 : index
    %c0_8 = arith.constant 0 : index
    %c0_9 = arith.constant 0 : index
    %6 = vector.load %arg4[%c0_7, %c0_8, %c0_9] : memref<4x16x16xf32, #tpu.memory_space<vmem>>, vector<1x16x16xf32>
    %7 = vector.shape_cast %6 : vector<1x16x16xf32> to vector<16x16xf32>
    %8 = vector.shape_cast %5 : vector<16x16xf32> to vector<1x16x16xf32>
    tpu.vector_store %arg4[%c0_7, %c0_8, %c0_9], %8 {strides = array<i32>} : memref<4x16x16xf32, #tpu.memory_space<vmem>>, vector<1x16x16xf32>,
    %c1 = arith.constant 1 : index
    %c0_10 = arith.constant 0 : index
    %c0_11 = arith.constant 0 : index
    %9 = vector.load %arg1[%c1, %c0_10, %c0_11] : memref<4x16x16xf32, #tpu.memory_space<vmem>>, vector<1x16x16xf32>
    %10 = vector.shape_cast %9 : vector<1x16x16xf32> to vector<16x16xf32>
    %cst_12 = arith.constant dense<0.000000e+00> : vector<16x16xf32>
    %11 = tpu.matmul %0, %10, %cst_12 {dimension_numbers = #tpu.dot_dimension_numbers<[1], [0], [0], [1], [0, 0, 1, 1], [], []>} : vector<16x16xf32>, vector<16x16xf32>, vector<16x16xf32> -> vector<16x16xf32>
    %cst_13 = arith.constant dense<0.000000e+00> : vector<16x16xf32>
    %12 = tpu.matmul %11, %1, %cst_13 {dimension_numbers = #tpu.dot_dimension_numbers<[1], [0], [0], [1], [0, 0, 1, 1], [], []>} : vector<16x16xf32>, vector<16x16xf32>, vector<16x16xf32> -> vector<16x16xf32>
    %c1_14 = arith.constant 1 : index
    %c0_15 = arith.constant 0 : index
    %c0_16 = arith.constant 0 : index
    %13 = vector.load %arg4[%c1_14, %c0_15, %c0_16] : memref<4x16x16xf32, #tpu.memory_space<vmem>>, vector<1x16x16xf32>
    %14 = vector.shape_cast %13 : vector<1x16x16xf32> to vector<16x16xf32>
    %15 = vector.shape_cast %12 : vector<16x16xf32> to vector<1x16x16xf32>
    tpu.vector_store %arg4[%c1_14, %c0_15, %c0_16], %15 {strides = array<i32>} : memref<4x16x16xf32, #tpu.memory_space<vmem>>, vector<1x16x16xf32>,
    %c2 = arith.constant 2 : index
    %c0_17 = arith.constant 0 : index
    %c0_18 = arith.constant 0 : index
    %16 = vector.load %arg1[%c2, %c0_17, %c0_18] : memref<4x16x16xf32, #tpu.memory_space<vmem>>, vector<1x16x16xf32>
    %17 = vector.shape_cast %16 : vector<1x16x16xf32> to vector<16x16xf32>
    %cst_19 = arith.constant dense<0.000000e+00> : vector<16x16xf32>
    %18 = tpu.matmul %0, %17, %cst_19 {dimension_numbers = #tpu.dot_dimension_numbers<[1], [0], [0], [1], [0, 0, 1, 1], [], []>} : vector<16x16xf32>, vector<16x16xf32>, vector<16x16xf32> -> vector<16x16xf32>
    %cst_20 = arith.constant dense<0.000000e+00> : vector<16x16xf32>
    %19 = tpu.matmul %18, %1, %cst_20 {dimension_numbers = #tpu.dot_dimension_numbers<[1], [0], [0], [1], [0, 0, 1, 1], [], []>} : vector<16x16xf32>, vector<16x16xf32>, vector<16x16xf32> -> vector<16x16xf32>
    %c2_21 = arith.constant 2 : index
    %c0_22 = arith.constant 0 : index
    %c0_23 = arith.constant 0 : index
    %20 = vector.load %arg4[%c2_21, %c0_22, %c0_23] : memref<4x16x16xf32, #tpu.memory_space<vmem>>, vector<1x16x16xf32>
    %21 = vector.shape_cast %20 : vector<1x16x16xf32> to vector<16x16xf32>
    %22 = vector.shape_cast %19 : vector<16x16xf32> to vector<1x16x16xf32>
    tpu.vector_store %arg4[%c2_21, %c0_22, %c0_23], %22 {strides = array<i32>} : memref<4x16x16xf32, #tpu.memory_space<vmem>>, vector<1x16x16xf32>,
    %c3 = arith.constant 3 : index
    %c0_24 = arith.constant 0 : index
    %c0_25 = arith.constant 0 : index
    %23 = vector.load %arg1[%c3, %c0_24, %c0_25] : memref<4x16x16xf32, #tpu.memory_space<vmem>>, vector<1x16x16xf32>
    %24 = vector.shape_cast %23 : vector<1x16x16xf32> to vector<16x16xf32>
    %cst_26 = arith.constant dense<0.000000e+00> : vector<16x16xf32>
    %25 = tpu.matmul %0, %24, %cst_26 {dimension_numbers = #tpu.dot_dimension_numbers<[1], [0], [0], [1], [0, 0, 1, 1], [], []>} : vector<16x16xf32>, vector<16x16xf32>, vector<16x16xf32> -> vector<16x16xf32>
    %cst_27 = arith.constant dense<0.000000e+00> : vector<16x16xf32>
    %26 = tpu.matmul %25, %1, %cst_27 {dimension_numbers = #tpu.dot_dimension_numbers<[1], [0], [0], [1], [0, 0, 1, 1], [], []>} : vector<16x16xf32>, vector<16x16xf32>, vector<16x16xf32> -> vector<16x16xf32>
    %c3_28 = arith.constant 3 : index
    %c0_29 = arith.constant 0 : index
    %c0_30 = arith.constant 0 : index
    %27 = vector.load %arg4[%c3_28, %c0_29, %c0_30] : memref<4x16x16xf32, #tpu.memory_space<vmem>>, vector<1x16x16xf32>
    %28 = vector.shape_cast %27 : vector<1x16x16xf32> to vector<16x16xf32>
    %29 = vector.shape_cast %26 : vector<16x16xf32> to vector<1x16x16xf32>
    tpu.vector_store %arg4[%c3_28, %c0_29, %c0_30], %29 {strides = array<i32>} : memref<4x16x16xf32, #tpu.memory_space<vmem>>, vector<1x16x16xf32>,
    return
  }
  func.func @transform_0(%arg0: i32) -> (i32, i32, i32) {
    %c0_i32 = arith.constant 0 : i32
    %c0_i32_0 = arith.constant 0 : i32
    %c0_i32_1 = arith.constant 0 : i32
    return %arg0, %c0_i32, %c0_i32_0 : i32, i32, i32
  }
  func.func @transform_1(%arg0: i32) -> (i32, i32) {
    %c0_i32 = arith.constant 0 : i32
    %c0_i32_0 = arith.constant 0 : i32
    %c0_i32_1 = arith.constant 0 : i32
    return %c0_i32, %c0_i32_0 : i32, i32
  }
  func.func @transform_2(%arg0: i32) -> (i32, i32) {
    %c0_i32 = arith.constant 0 : i32
    %c0_i32_0 = arith.constant 0 : i32
    %c0_i32_1 = arith.constant 0 : i32
    return %c0_i32, %c0_i32_0 : i32, i32
  }
  func.func @transform_3(%arg0: i32) -> (i32, i32, i32) {
    %c0_i32 = arith.constant 0 : i32
    %c0_i32_0 = arith.constant 0 : i32
    %c0_i32_1 = arith.constant 0 : i32
    return %arg0, %c0_i32, %c0_i32_0 : i32, i32, i32
  }
}

</mosaic_0001>

<llo_original>
// kernel: tpu_custom_call.1
$region0: #{tpu_custom_call.1}
  #allocation0 [shape = 'u32[]', space=smem, size = 0x4, offset = 0x4, fixed_abs, tag = 'smem constant byte address 0x4 - core index']
  #allocation1 [shape = 'u32[144,128]{1,0:T(1,128)}', space=vmem, size = 0x12000, scoped, tag = 'internal scratch']
  %s0 = inlined_call_operand.hbm [shape: f32[8,16,16], index: 0, kind: input, shape index: {}]
  %s1 = inlined_call_operand.hbm [shape: f32[16,16], index: 1, kind: input, shape index: {}]
  %s2 = inlined_call_operand.hbm [shape: f32[16,16], index: 2, kind: input, shape index: {}]
  %s3 = inlined_call_operand.hbm [shape: f32[8,16,16], index: 3, kind: output, shape index: {}]
  %s4 = sld [smem:[#allocation0]]
  $region57: #{tpu_custom_call.1} parent=0
    _
  %s6 = ssub.s32 1, %s4
  %s7 = scalar_select 0, %s6, %s4
  $region1: #{tpu_custom_call.1} parent=0
    #allocation2 [shape = 'u8[65536]{0}', space=vmem, size = 0x10000, scoped, tag = 'input window, operand 0']
    #allocation3 [shape = 's32[2]{0}', space=sflag, size = 0x8, scoped, tag = 'scoped memory for tpu_custom_call.1']
    #allocation4 [shape = 's32[2]{0}', space=sflag, size = 0x8, scoped, tag = 'scoped memory for tpu_custom_call.1']
    #allocation5 [shape = 'u8[8192]{0}', space=vmem, size = 0x2000, scoped, tag = 'input window, operand 1, single buffered']
    #allocation6 [shape = 's32[1]{0}', space=sflag, size = 0x4, scoped, tag = 'scoped memory for tpu_custom_call.1']
    #allocation7 [shape = 'u8[8192]{0}', space=vmem, size = 0x2000, scoped, tag = 'input window, operand 2, single buffered']
    #allocation8 [shape = 'u8[65536]{0}', space=vmem, size = 0x10000, scoped, tag = 'output window, operand 0']
    %8 = vsyncpa [#allocation3], 0
    %s9 = scalar_lea.sflag [#allocation3], 1
    %10 = vsyncpa %s9, 0
    %11 = vsyncpa [#allocation6], 0
    %12 = vsyncpa [#allocation4], 0
    %s13 = scalar_lea.sflag [#allocation4], 1
    %14 = vsyncpa %s13, 0
    loop: start=0, step=1, limit=4
    $region2: #{tpu_custom_call.1} parent=1 // loop_pre_header
      _
    $region3: #{tpu_custom_call.1} parent=1 // loop_header
      %s16 = sphi 0, %s20
      %p17 = scmp.ge.s32.totalorder %s16, 4
      %s26 = sphi 0, %s28
      %s29 = sphi 0, %s26
      %s30 = sphi 0, %s29
      %s46 = sphi 0, %s30
      %s50 = sphi 0, %s50
      %s52 = sphi 0, %s50
      %s53 = sphi 0, %s52
      %s67 = sphi 0, %s53
      %s71 = sphi 0, %s71
      %s73 = sphi 0, %s71
      %s74 = sphi 0, %s73
      %s88 = sphi 0, %s74
      %s94 = sphi 0, %s96
      %s97 = sphi 0, %s94
      %s98 = sphi 0, %s97
      %s114 = sphi 0, %s98
    $region4: #{tpu_custom_call.1} parent=1 // loop_header_branch
      %19 = sbr.rel (%p17) target = $region8
    $region5: #{tpu_custom_call.1} parent=1 // loop_body
      %s21 = ssub.s32 %s16, 1
      %s22 = ssub.s32 %s16, 2
      %s23 = sadd.s32 %s16, 1
      %s24 = ssub.s32 %s16, %s23
      %p25 = scmp.eq.s32.totalorder %s24, 0
      %s27 = sadd.s32 %s26, 1
      %s28 = scalar_select %p25, %s26, %s27
      %p31 = pneg %p25
      %p32 = scmp.eq.s32.totalorder %s16, 1
      %p33 = por %p31, %p32
      %p34 = scmp.ne.s32.totalorder %s26, %s29
      %p35 = scmp.eq.s32.totalorder %s16, 0
      %p36 = por %p34, %p35
      %p37 = scmp.ne.s32.totalorder %s26, %s29
      %p38 = scmp.eq.s32.totalorder %s21, 1
      %p39 = por %p37, %p38
      %p40 = scmp.ne.s32.totalorder %s29, %s30
      %p41 = scmp.eq.s32.totalorder %s21, 0
      %p42 = por %p40, %p41
      %p43 = scmp.ne.s32.totalorder %s29, %s30
      %p44 = scmp.eq.s32.totalorder %s22, 1
      %p45 = por %p43, %p44
      %p47 = scmp.ne.s32.totalorder %s30, %s46
      %p48 = scmp.eq.s32.totalorder %s22, 0
      %p49 = por %p47, %p48
      %s51 = sadd.s32 %s50, 1
      %p54 = scmp.eq.s32.totalorder %s16, 1
      %p55 = scmp.ne.s32.totalorder %s50, %s52
      %p56 = scmp.eq.s32.totalorder %s16, 0
      %p57 = por %p55, %p56
      %p58 = scmp.ne.s32.totalorder %s50, %s52
      %p59 = scmp.eq.s32.totalorder %s21, 1
      %p60 = por %p58, %p59
      %p61 = scmp.ne.s32.totalorder %s52, %s53
      %p62 = scmp.eq.s32.totalorder %s21, 0
      %p63 = por %p61, %p62
      %p64 = scmp.ne.s32.totalorder %s52, %s53
      %p65 = scmp.eq.s32.totalorder %s22, 1
      %p66 = por %p64, %p65
      %p68 = scmp.ne.s32.totalorder %s53, %s67
      %p69 = scmp.eq.s32.totalorder %s22, 0
      %p70 = por %p68, %p69
      %s72 = sadd.s32 %s71, 1
      %p75 = scmp.eq.s32.totalorder %s16, 1
      %p76 = scmp.ne.s32.totalorder %s71, %s73
      %p77 = scmp.eq.s32.totalorder %s16, 0
      %p78 = por %p76, %p77
      %p79 = scmp.ne.s32.totalorder %s71, %s73
      %p80 = scmp.eq.s32.totalorder %s21, 1
      %p81 = por %p79, %p80
      %p82 = scmp.ne.s32.totalorder %s73, %s74
      %p83 = scmp.eq.s32.totalorder %s21, 0
      %p84 = por %p82, %p83
      %p85 = scmp.ne.s32.totalorder %s73, %s74
      %p86 = scmp.eq.s32.totalorder %s22, 1
      %p87 = por %p85, %p86
      %p89 = scmp.ne.s32.totalorder %s74, %s88
      %p90 = scmp.eq.s32.totalorder %s22, 0
      %p91 = por %p89, %p90
      %s92 = ssub.s32 %s16, %s23
      %p93 = scmp.eq.s32.totalorder %s92, 0
      %s95 = sadd.s32 %s94, 1
      %s96 = scalar_select %p93, %s94, %s95
      %p99 = pneg %p93
      %p100 = scmp.eq.s32.totalorder %s16, 1
      %p101 = por %p99, %p100
      %p102 = scmp.ne.s32.totalorder %s94, %s97
      %p103 = scmp.eq.s32.totalorder %s16, 0
      %p104 = por %p102, %p103
      %p105 = scmp.ne.s32.totalorder %s94, %s97
      %p106 = scmp.eq.s32.totalorder %s21, 1
      %p107 = por %p105, %p106
      %p108 = scmp.ne.s32.totalorder %s97, %s98
      %p109 = scmp.eq.s32.totalorder %s21, 0
      %p110 = por %p108, %p109
      %p111 = scmp.ne.s32.totalorder %s97, %s98
      %p112 = scmp.eq.s32.totalorder %s22, 1
      %p113 = por %p111, %p112
      %p115 = scmp.ne.s32.totalorder %s98, %s114
      %p116 = scmp.eq.s32.totalorder %s22, 0
      %p117 = por %p115, %p116
      %p118 = scmp.le.s32.totalorder 1, %s16
      %p119 = scmp.lt.s32.totalorder %s16, 3
      %p120 = pnand %p118, %p119
      %p121 = pneg %p120
      // Predicated region
      $region9: #{tpu_custom_call.1} parent=5 // pred_check
        _
      $region10: #{tpu_custom_call.1} parent=5 // pred_check_branch
        %123 = sbr.rel (%p120) target = $region12
      $region11: #{tpu_custom_call.1} parent=5 // pred_region
        %s124 = ssub.s32 %s16, 1
        // Predicated region
        $region13: #{tpu_custom_call.1} parent=11 // pred_check
          %p125 = pneg %p63
        $region14: #{tpu_custom_call.1} parent=11 // pred_check_branch
          %127 = sbr.rel (%p125) target = $region16
        $region15: #{tpu_custom_call.1} parent=11 // pred_region
          %s129 = ssub.s32 256, 256
          %130 = vsyncadd [#allocation6], %s129
          %s131 = sshll.u32 [#allocation5], 4
          %s132 = int_to_ptr.vmem [resolvable:$true] %s131
          %137 = dma.hbm_to_vmem [thread:$0]  %s1, 256, %s132, [#allocation6], 128, 128, 8
        $region16: #{tpu_custom_call.1} parent=11 // pred_fallthru
          _
        // Predicated region
        $region17: #{tpu_custom_call.1} parent=11 // pred_check
          %p138 = pneg %p84
        $region18: #{tpu_custom_call.1} parent=11 // pred_check_branch
          %140 = sbr.rel (%p138) target = $region20
        $region19: #{tpu_custom_call.1} parent=11 // pred_region
          %s142 = ssub.s32 256, 256
          %143 = vsyncadd [#allocation6], %s142
          %s144 = sshll.u32 [#allocation7], 4
          %s145 = int_to_ptr.vmem [resolvable:$true] %s144
          %150 = dma.hbm_to_vmem [thread:$0]  %s2, 256, %s145, [#allocation6], 128, 128, 8
        $region20: #{tpu_custom_call.1} parent=11 // pred_fallthru
          _
      $region12: #{tpu_custom_call.1} parent=5 // pred_fallthru
        _
      %p151 = scmp.lt.s32.totalorder %s16, 2
      // Predicated region
      $region21: #{tpu_custom_call.1} parent=5 // pred_check
        %p152 = pneg %p151
      $region22: #{tpu_custom_call.1} parent=5 // pred_check_branch
        %154 = sbr.rel (%p152) target = $region24
      $region23: #{tpu_custom_call.1} parent=5 // pred_region
        // Predicated region
        $region25: #{tpu_custom_call.1} parent=23 // pred_check
          %p155 = pneg %p36
        $region26: #{tpu_custom_call.1} parent=23 // pred_check_branch
          %157 = sbr.rel (%p155) target = $region28
        $region27: #{tpu_custom_call.1} parent=23 // pred_region
          %s158 = sand.u32 %s26, 1
          %s159 = scalar_lea.sflag [#allocation3], %s158
          %s160 = sand.u32 %s26, 1
          %s161 = smul.addr %s160, 64
          %s162 = scalar_lea.vmem [#allocation2], %s161
          %s163 = smul.u32 4, %s16
          %s165 = ssub.s32 1024, 1024
          %166 = vsyncadd %s159, %s165
          %s167 = smul.addr %s163, 2
          %s168 = smul.addr %s167, 128
          %s169 = scalar_lea.hbm %s0, %s168
          %s170 = sshll.u32 %s162, 4
          %s171 = int_to_ptr.vmem [resolvable:$true] %s170
          %176 = dma.hbm_to_vmem [thread:$0]  %s169, 1024, %s171, %s159, 128, 128, 8
        $region28: #{tpu_custom_call.1} parent=23 // pred_fallthru
          _
      $region24: #{tpu_custom_call.1} parent=5 // pred_fallthru
        _
      %p177 = scmp.le.s32.totalorder 1, %s16
      %p178 = scmp.lt.s32.totalorder %s16, 3
      %p179 = pnand %p177, %p178
      %p180 = pneg %p179
      // Predicated region
      $region29: #{tpu_custom_call.1} parent=5 // pred_check
        _
      $region30: #{tpu_custom_call.1} parent=5 // pred_check_branch
        %182 = sbr.rel (%p179) target = $region32
      $region31: #{tpu_custom_call.1} parent=5 // pred_region
        %s183 = ssub.s32 %s16, 1
        %s184 = sand.u32 %s29, 1
        %s185 = scalar_lea.sflag [#allocation3], %s184
        %s186 = sand.u32 %s29, 1
        %s187 = smul.addr %s186, 64
        %s188 = scalar_lea.vmem [#allocation2], %s187
        // Predicated region
        $region33: #{tpu_custom_call.1} parent=31 // pred_check
          %p189 = pneg %p42
        $region34: #{tpu_custom_call.1} parent=31 // pred_check_branch
          %191 = sbr.rel (%p189) target = $region36
        $region35: #{tpu_custom_call.1} parent=31 // pred_region
          %192 = dma.done %s185, 1024
        $region36: #{tpu_custom_call.1} parent=31 // pred_fallthru
          _
        // Predicated region
        $region37: #{tpu_custom_call.1} parent=31 // pred_check
          %p193 = pneg %p63
        $region38: #{tpu_custom_call.1} parent=31 // pred_check_branch
          %195 = sbr.rel (%p193) target = $region40
        $region39: #{tpu_custom_call.1} parent=31 // pred_region
          %196 = dma.done [#allocation6], 256
        $region40: #{tpu_custom_call.1} parent=31 // pred_fallthru
          _
        // Predicated region
        $region41: #{tpu_custom_call.1} parent=31 // pred_check
          %p197 = pneg %p84
        $region42: #{tpu_custom_call.1} parent=31 // pred_check_branch
          %199 = sbr.rel (%p197) target = $region44
        $region43: #{tpu_custom_call.1} parent=31 // pred_region
          %200 = dma.done [#allocation6], 256
        $region44: #{tpu_custom_call.1} parent=31 // pred_fallthru
          _
        %s201 = sand.u32 %s29, 1
        %s202 = scalar_lea.sflag [#allocation3], %s201
        %s203 = sand.u32 %s29, 1
        %s204 = smul.addr %s203, 64
        %s205 = scalar_lea.vmem [#allocation2], %s204
        %p206 = pneg %p42
        %p207 = pneg %p39
        %p208 = pneg %p63
        %p209 = pneg %p60
        %p210 = pneg %p84
        %p211 = pneg %p81
        %p212 = pneg %p110
        %p213 = pneg %p107
        %s214 = sand.u32 %s97, 1
        %s215 = scalar_lea.sflag [#allocation4], %s214
        %s216 = sand.u32 %s97, 1
        %s217 = smul.addr %s216, 64
        %s218 = scalar_lea.vmem [#allocation8], %s217
        %s219 = smul.u32 4, %s21
        %s220 = smul.u32 4, %s21
        %v221 = vld [vmem:[#allocation5] sm:$0xff]
        %v222 = vld [vmem:[#allocation5 + $0x8] sm:$0xff]
        %v223 = vld [vmem:[#allocation7] sm:$0xff]
        %v224 = vld [vmem:[#allocation7 + $0x8] sm:$0xff]
        %v225 = vld [vmem:[%s188] sm:$0xff]
        %v226 = vld [vmem:[%s188 + $0x8] sm:$0xff]
        %vm227 = vcmask 130048
        %v229 = vsel %vm227, %v221, 0
        %v232 = vsel %vm227, %v222, 0
        %234 = vmatprep.subr.mxu0 0.0
        %235 = vmatpush1.msra.mxu0 0.0
        %236 = vmatprep.subr.mxu0 0.0
        %237 = vmatpush1.msra.mxu0 0.0
        %238 = vmatprep.subr.mxu0 0.0
        %239 = vmatpush1.msra.mxu0 0.0
        %240 = vmatprep.subr.mxu0 0.0
        %241 = vmatpush1.msra.mxu0 0.0
        %242 = vmatprep.subr.mxu0 0.0
        %243 = vmatpush1.msra.mxu0 0.0
        %244 = vmatprep.subr.mxu0 0.0
        %245 = vmatpush1.msra.mxu0 0.0
        %246 = vmatprep.subr.mxu0 0.0
        %247 = vmatpush1.msra.mxu0 0.0
        %248 = vmatprep.subr.mxu0 0.0
        %249 = vmatpush1.msra.mxu0 0.0
        %250 = vmatprep.subr.mxu0 0.0
        %251 = vmatpush1.msra.mxu0 0.0
        %252 = vmatprep.subr.mxu0 0.0
        %253 = vmatpush1.msra.mxu0 0.0
        %254 = vmatprep.subr.mxu0 0.0
        %255 = vmatpush1.msra.mxu0 0.0
        %256 = vmatprep.subr.mxu0 0.0
        %257 = vmatpush1.msra.mxu0 0.0
        %258 = vmatprep.subr.mxu0 0.0
        %259 = vmatpush1.msra.mxu0 0.0
        %260 = vmatprep.subr.mxu0 0.0
        %261 = vmatpush1.msra.mxu0 0.0
        %262 = vmatprep.subr.mxu0 0.0
        %263 = vmatpush1.msra.mxu0 %v226
        %264 = vmatprep.subr.mxu0 0.0
        %265 = vmatpush1.msra.mxu0 %v225
        %266 = vmatprep.subr.mxu0 0.0
        %267 = vmatpush2.msra.mxu0 0.0
        %268 = vmatprep.subr.mxu0 0.0
        %269 = vmatpush2.msra.mxu0 0.0
        %270 = vmatprep.subr.mxu0 0.0
        %271 = vmatpush2.msra.mxu0 0.0
        %272 = vmatprep.subr.mxu0 0.0
        %273 = vmatpush2.msra.mxu0 0.0
        %274 = vmatprep.subr.mxu0 0.0
        %275 = vmatpush2.msra.mxu0 0.0
        %276 = vmatprep.subr.mxu0 0.0
        %277 = vmatpush2.msra.mxu0 0.0
        %278 = vmatprep.subr.mxu0 0.0
        %279 = vmatpush2.msra.mxu0 0.0
        %280 = vmatprep.subr.mxu0 0.0
        %281 = vmatpush2.msra.mxu0 0.0
        %282 = vmatprep.subr.mxu0 0.0
        %283 = vmatpush2.msra.mxu0 0.0
        %284 = vmatprep.subr.mxu0 0.0
        %285 = vmatpush2.msra.mxu0 0.0
        %286 = vmatprep.subr.mxu0 0.0
        %287 = vmatpush2.msra.mxu0 0.0
        %288 = vmatprep.subr.mxu0 0.0
        %289 = vmatpush2.msra.mxu0 0.0
        %290 = vmatprep.subr.mxu0 0.0
        %291 = vmatpush2.msra.mxu0 0.0
        %292 = vmatprep.subr.mxu0 0.0
        %293 = vmatpush2.msra.mxu0 0.0
        %294 = vmatprep.subr.mxu0 0.0
        %295 = vmatpush2.msra.mxu0 0.0
        %296 = vmatprep.subr.mxu0 0.0
        %297 = vmatpush2.msra.mxu0 0.0
        %298 = vmatprep.mubr.f32.mxu0 0.0
        %299 = vmatmul.mubr.f32.gmra.mxu0 %v229
        %v300 = vpop.f32.mrf.mxu0
        %v301 = vadd.f32 0.0, %v300
        %v302 = vpop.f32.mrf.mxu0
        %303 = vmatprep.mubr.f32.mxu0 0.0
        %304 = vmatmul.mubr.f32.gmra.mxu0 %v232
        %v305 = vpop.f32.mrf.mxu0
        %v306 = vadd.f32 0.0, %v305
        %v307 = vpop.f32.mrf.mxu0
        %308 = vdwg.mxu0
        %v310 = vsel %vm227, %v301, 0
        %v313 = vsel %vm227, %v306, 0
        %315 = vmatprep.subr.mxu0 0.0
        %316 = vmatpush1.msra.mxu0 0.0
        %317 = vmatprep.subr.mxu0 0.0
        %318 = vmatpush1.msra.mxu0 0.0
        %319 = vmatprep.subr.mxu0 0.0
        %320 = vmatpush1.msra.mxu0 0.0
        %321 = vmatprep.subr.mxu0 0.0
        %322 = vmatpush1.msra.mxu0 0.0
        %323 = vmatprep.subr.mxu0 0.0
        %324 = vmatpush1.msra.mxu0 0.0
        %325 = vmatprep.subr.mxu0 0.0
        %326 = vmatpush1.msra.mxu0 0.0
        %327 = vmatprep.subr.mxu0 0.0
        %328 = vmatpush1.msra.mxu0 0.0
        %329 = vmatprep.subr.mxu0 0.0
        %330 = vmatpush1.msra.mxu0 0.0
        %331 = vmatprep.subr.mxu0 0.0
        %332 = vmatpush1.msra.mxu0 0.0
        %333 = vmatprep.subr.mxu0 0.0
        %334 = vmatpush1.msra.mxu0 0.0
        %335 = vmatprep.subr.mxu0 0.0
        %336 = vmatpush1.msra.mxu0 0.0
        %337 = vmatprep.subr.mxu0 0.0
        %338 = vmatpush1.msra.mxu0 0.0
        %339 = vmatprep.subr.mxu0 0.0
        %340 = vmatpush1.msra.mxu0 0.0
        %341 = vmatprep.subr.mxu0 0.0
        %342 = vmatpush1.msra.mxu0 0.0
        %343 = vmatprep.subr.mxu0 0.0
        %344 = vmatpush1.msra.mxu0 %v224
        %345 = vmatprep.subr.mxu0 0.0
        %346 = vmatpush1.msra.mxu0 %v223
        %347 = vmatprep.subr.mxu0 0.0
        %348 = vmatpush2.msra.mxu0 0.0
        %349 = vmatprep.subr.mxu0 0.0
        %350 = vmatpush2.msra.mxu0 0.0
        %351 = vmatprep.subr.mxu0 0.0
        %352 = vmatpush2.msra.mxu0 0.0
        %353 = vmatprep.subr.mxu0 0.0
        %354 = vmatpush2.msra.mxu0 0.0
        %355 = vmatprep.subr.mxu0 0.0
        %356 = vmatpush2.msra.mxu0 0.0
        %357 = vmatprep.subr.mxu0 0.0
        %358 = vmatpush2.msra.mxu0 0.0
        %359 = vmatprep.subr.mxu0 0.0
        %360 = vmatpush2.msra.mxu0 0.0
        %361 = vmatprep.subr.mxu0 0.0
        %362 = vmatpush2.msra.mxu0 0.0
        %363 = vmatprep.subr.mxu0 0.0
        %364 = vmatpush2.msra.mxu0 0.0
        %365 = vmatprep.subr.mxu0 0.0
        %366 = vmatpush2.msra.mxu0 0.0
        %367 = vmatprep.subr.mxu0 0.0
        %368 = vmatpush2.msra.mxu0 0.0
        %369 = vmatprep.subr.mxu0 0.0
        %370 = vmatpush2.msra.mxu0 0.0
        %371 = vmatprep.subr.mxu0 0.0
        %372 = vmatpush2.msra.mxu0 0.0
        %373 = vmatprep.subr.mxu0 0.0
        %374 = vmatpush2.msra.mxu0 0.0
        %375 = vmatprep.subr.mxu0 0.0
        %376 = vmatpush2.msra.mxu0 0.0
        %377 = vmatprep.subr.mxu0 0.0
        %378 = vmatpush2.msra.mxu0 0.0
        %379 = vmatprep.mubr.f32.mxu0 0.0
        %380 = vmatmul.mubr.f32.gmra.mxu0 %v310
        %v381 = vpop.f32.mrf.mxu0
        %v382 = vadd.f32 0.0, %v381
        %v383 = vpop.f32.mrf.mxu0
        %384 = vmatprep.mubr.f32.mxu0 0.0
        %385 = vmatmul.mubr.f32.gmra.mxu0 %v313
        %v386 = vpop.f32.mrf.mxu0
        %v387 = vadd.f32 0.0, %v386
        %v388 = vpop.f32.mrf.mxu0
        %389 = vdwg.mxu0
        %390 = vst.msk [vmem:[%s218] sm:$0xff] %vm227, %v382
        %391 = vst.msk [vmem:[%s218 + $0x8] sm:$0xff] %vm227, %v387
        %s392 = scalar_lea.vmem %s188, 16 [#allocation2]
        %v393 = vld [vmem:[%s392] sm:$0xff]
        %v394 = vld [vmem:[%s392 + $0x8] sm:$0xff]
        %395 = vmatprep.subr.mxu0 0.0
        %396 = vmatpush1.msra.mxu0 0.0
        %397 = vmatprep.subr.mxu0 0.0
        %398 = vmatpush1.msra.mxu0 0.0
        %399 = vmatprep.subr.mxu0 0.0
        %400 = vmatpush1.msra.mxu0 0.0
        %401 = vmatprep.subr.mxu0 0.0
        %402 = vmatpush1.msra.mxu0 0.0
        %403 = vmatprep.subr.mxu0 0.0
        %404 = vmatpush1.msra.mxu0 0.0
        %405 = vmatprep.subr.mxu0 0.0
        %406 = vmatpush1.msra.mxu0 0.0
        %407 = vmatprep.subr.mxu0 0.0
        %408 = vmatpush1.msra.mxu0 0.0
        %409 = vmatprep.subr.mxu0 0.0
        %410 = vmatpush1.msra.mxu0 0.0
        %411 = vmatprep.subr.mxu0 0.0
        %412 = vmatpush1.msra.mxu0 0.0
        %413 = vmatprep.subr.mxu0 0.0
        %414 = vmatpush1.msra.mxu0 0.0
        %415 = vmatprep.subr.mxu0 0.0
        %416 = vmatpush1.msra.mxu0 0.0
        %417 = vmatprep.subr.mxu0 0.0
        %418 = vmatpush1.msra.mxu0 0.0
        %419 = vmatprep.subr.mxu0 0.0
        %420 = vmatpush1.msra.mxu0 0.0
        %421 = vmatprep.subr.mxu0 0.0
        %422 = vmatpush1.msra.mxu0 0.0
        %423 = vmatprep.subr.mxu0 0.0
        %424 = vmatpush1.msra.mxu0 %v394
        %425 = vmatprep.subr.mxu0 0.0
        %426 = vmatpush1.msra.mxu0 %v393
        %427 = vmatprep.subr.mxu0 0.0
        %428 = vmatpush2.msra.mxu0 0.0
        %429 = vmatprep.subr.mxu0 0.0
        %430 = vmatpush2.msra.mxu0 0.0
        %431 = vmatprep.subr.mxu0 0.0
        %432 = vmatpush2.msra.mxu0 0.0
        %433 = vmatprep.subr.mxu0 0.0
        %434 = vmatpush2.msra.mxu0 0.0
        %435 = vmatprep.subr.mxu0 0.0
        %436 = vmatpush2.msra.mxu0 0.0
        %437 = vmatprep.subr.mxu0 0.0
        %438 = vmatpush2.msra.mxu0 0.0
        %439 = vmatprep.subr.mxu0 0.0
        %440 = vmatpush2.msra.mxu0 0.0
        %441 = vmatprep.subr.mxu0 0.0
        %442 = vmatpush2.msra.mxu0 0.0
        %443 = vmatprep.subr.mxu0 0.0
        %444 = vmatpush2.msra.mxu0 0.0
        %445 = vmatprep.subr.mxu0 0.0
        %446 = vmatpush2.msra.mxu0 0.0
        %447 = vmatprep.subr.mxu0 0.0
        %448 = vmatpush2.msra.mxu0 0.0
        %449 = vmatprep.subr.mxu0 0.0
        %450 = vmatpush2.msra.mxu0 0.0
        %451 = vmatprep.subr.mxu0 0.0
        %452 = vmatpush2.msra.mxu0 0.0
        %453 = vmatprep.subr.mxu0 0.0
        %454 = vmatpush2.msra.mxu0 0.0
        %455 = vmatprep.subr.mxu0 0.0
        %456 = vmatpush2.msra.mxu0 0.0
        %457 = vmatprep.subr.mxu0 0.0
        %458 = vmatpush2.msra.mxu0 0.0
        %459 = vmatprep.mubr.f32.mxu0 0.0
        %460 = vmatmul.mubr.f32.gmra.mxu0 %v229
        %v461 = vpop.f32.mrf.mxu0
        %v462 = vadd.f32 0.0, %v461
        %v463 = vpop.f32.mrf.mxu0
        %464 = vmatprep.mubr.f32.mxu0 0.0
        %465 = vmatmul.mubr.f32.gmra.mxu0 %v232
        %v466 = vpop.f32.mrf.mxu0
        %v467 = vadd.f32 0.0, %v466
        %v468 = vpop.f32.mrf.mxu0
        %469 = vdwg.mxu0
        %v471 = vsel %vm227, %v462, 0
        %v474 = vsel %vm227, %v467, 0
        %476 = vmatprep.subr.mxu0 0.0
        %477 = vmatpush1.msra.mxu0 0.0
        %478 = vmatprep.subr.mxu0 0.0
        %479 = vmatpush1.msra.mxu0 0.0
        %480 = vmatprep.subr.mxu0 0.0
        %481 = vmatpush1.msra.mxu0 0.0
        %482 = vmatprep.subr.mxu0 0.0
        %483 = vmatpush1.msra.mxu0 0.0
        %484 = vmatprep.subr.mxu0 0.0
        %485 = vmatpush1.msra.mxu0 0.0
        %486 = vmatprep.subr.mxu0 0.0
        %487 = vmatpush1.msra.mxu0 0.0
        %488 = vmatprep.subr.mxu0 0.0
        %489 = vmatpush1.msra.mxu0 0.0
        %490 = vmatprep.subr.mxu0 0.0
        %491 = vmatpush1.msra.mxu0 0.0
        %492 = vmatprep.subr.mxu0 0.0
        %493 = vmatpush1.msra.mxu0 0.0
        %494 = vmatprep.subr.mxu0 0.0
        %495 = vmatpush1.msra.mxu0 0.0
        %496 = vmatprep.subr.mxu0 0.0
        %497 = vmatpush1.msra.mxu0 0.0
        %498 = vmatprep.subr.mxu0 0.0
        %499 = vmatpush1.msra.mxu0 0.0
        %500 = vmatprep.subr.mxu0 0.0
        %501 = vmatpush1.msra.mxu0 0.0
        %502 = vmatprep.subr.mxu0 0.0
        %503 = vmatpush1.msra.mxu0 0.0
        %504 = vmatprep.subr.mxu0 0.0
        %505 = vmatpush1.msra.mxu0 %v224
        %506 = vmatprep.subr.mxu0 0.0
        %507 = vmatpush1.msra.mxu0 %v223
        %508 = vmatprep.subr.mxu0 0.0
        %509 = vmatpush2.msra.mxu0 0.0
        %510 = vmatprep.subr.mxu0 0.0
        %511 = vmatpush2.msra.mxu0 0.0
        %512 = vmatprep.subr.mxu0 0.0
        %513 = vmatpush2.msra.mxu0 0.0
        %514 = vmatprep.subr.mxu0 0.0
        %515 = vmatpush2.msra.mxu0 0.0
        %516 = vmatprep.subr.mxu0 0.0
        %517 = vmatpush2.msra.mxu0 0.0
        %518 = vmatprep.subr.mxu0 0.0
        %519 = vmatpush2.msra.mxu0 0.0
        %520 = vmatprep.subr.mxu0 0.0
        %521 = vmatpush2.msra.mxu0 0.0
        %522 = vmatprep.subr.mxu0 0.0
        %523 = vmatpush2.msra.mxu0 0.0
        %524 = vmatprep.subr.mxu0 0.0
        %525 = vmatpush2.msra.mxu0 0.0
        %526 = vmatprep.subr.mxu0 0.0
        %527 = vmatpush2.msra.mxu0 0.0
        %528 = vmatprep.subr.mxu0 0.0
        %529 = vmatpush2.msra.mxu0 0.0
        %530 = vmatprep.subr.mxu0 0.0
        %531 = vmatpush2.msra.mxu0 0.0
        %532 = vmatprep.subr.mxu0 0.0
        %533 = vmatpush2.msra.mxu0 0.0
        %534 = vmatprep.subr.mxu0 0.0
        %535 = vmatpush2.msra.mxu0 0.0
        %536 = vmatprep.subr.mxu0 0.0
        %537 = vmatpush2.msra.mxu0 0.0
        %538 = vmatprep.subr.mxu0 0.0
        %539 = vmatpush2.msra.mxu0 0.0
        %540 = vmatprep.mubr.f32.mxu0 0.0
        %541 = vmatmul.mubr.f32.gmra.mxu0 %v471
        %v542 = vpop.f32.mrf.mxu0
        %v543 = vadd.f32 0.0, %v542
        %v544 = vpop.f32.mrf.mxu0
        %545 = vmatprep.mubr.f32.mxu0 0.0
        %546 = vmatmul.mubr.f32.gmra.mxu0 %v474
        %v547 = vpop.f32.mrf.mxu0
        %v548 = vadd.f32 0.0, %v547
        %v549 = vpop.f32.mrf.mxu0
        %550 = vdwg.mxu0
        %s551 = scalar_lea.vmem %s218, 16 [#allocation8]
        %552 = vst.msk [vmem:[%s551] sm:$0xff] %vm227, %v543
        %553 = vst.msk [vmem:[%s551 + $0x8] sm:$0xff] %vm227, %v548
        %s554 = scalar_lea.vmem %s188, 32 [#allocation2]
        %v555 = vld [vmem:[%s554] sm:$0xff]
        %v556 = vld [vmem:[%s554 + $0x8] sm:$0xff]
        %557 = vmatprep.subr.mxu0 0.0
        %558 = vmatpush1.msra.mxu0 0.0
        %559 = vmatprep.subr.mxu0 0.0
        %560 = vmatpush1.msra.mxu0 0.0
        %561 = vmatprep.subr.mxu0 0.0
        %562 = vmatpush1.msra.mxu0 0.0
        %563 = vmatprep.subr.mxu0 0.0
        %564 = vmatpush1.msra.mxu0 0.0
        %565 = vmatprep.subr.mxu0 0.0
        %566 = vmatpush1.msra.mxu0 0.0
        %567 = vmatprep.subr.mxu0 0.0
        %568 = vmatpush1.msra.mxu0 0.0
        %569 = vmatprep.subr.mxu0 0.0
        %570 = vmatpush1.msra.mxu0 0.0
        %571 = vmatprep.subr.mxu0 0.0
        %572 = vmatpush1.msra.mxu0 0.0
        %573 = vmatprep.subr.mxu0 0.0
        %574 = vmatpush1.msra.mxu0 0.0
        %575 = vmatprep.subr.mxu0 0.0
        %576 = vmatpush1.msra.mxu0 0.0
        %577 = vmatprep.subr.mxu0 0.0
        %578 = vmatpush1.msra.mxu0 0.0
        %579 = vmatprep.subr.mxu0 0.0
        %580 = vmatpush1.msra.mxu0 0.0
        %581 = vmatprep.subr.mxu0 0.0
        %582 = vmatpush1.msra.mxu0 0.0
        %583 = vmatprep.subr.mxu0 0.0
        %584 = vmatpush1.msra.mxu0 0.0
        %585 = vmatprep.subr.mxu0 0.0
        %586 = vmatpush1.msra.mxu0 %v556
        %587 = vmatprep.subr.mxu0 0.0
        %588 = vmatpush1.msra.mxu0 %v555
        %589 = vmatprep.subr.mxu0 0.0
        %590 = vmatpush2.msra.mxu0 0.0
        %591 = vmatprep.subr.mxu0 0.0
        %592 = vmatpush2.msra.mxu0 0.0
        %593 = vmatprep.subr.mxu0 0.0
        %594 = vmatpush2.msra.mxu0 0.0
        %595 = vmatprep.subr.mxu0 0.0
        %596 = vmatpush2.msra.mxu0 0.0
        %597 = vmatprep.subr.mxu0 0.0
        %598 = vmatpush2.msra.mxu0 0.0
        %599 = vmatprep.subr.mxu0 0.0
        %600 = vmatpush2.msra.mxu0 0.0
        %601 = vmatprep.subr.mxu0 0.0
        %602 = vmatpush2.msra.mxu0 0.0
        %603 = vmatprep.subr.mxu0 0.0
        %604 = vmatpush2.msra.mxu0 0.0
        %605 = vmatprep.subr.mxu0 0.0
        %606 = vmatpush2.msra.mxu0 0.0
        %607 = vmatprep.subr.mxu0 0.0
        %608 = vmatpush2.msra.mxu0 0.0
        %609 = vmatprep.subr.mxu0 0.0
        %610 = vmatpush2.msra.mxu0 0.0
        %611 = vmatprep.subr.mxu0 0.0
        %612 = vmatpush2.msra.mxu0 0.0
        %613 = vmatprep.subr.mxu0 0.0
        %614 = vmatpush2.msra.mxu0 0.0
        %615 = vmatprep.subr.mxu0 0.0
        %616 = vmatpush2.msra.mxu0 0.0
        %617 = vmatprep.subr.mxu0 0.0
        %618 = vmatpush2.msra.mxu0 0.0
        %619 = vmatprep.subr.mxu0 0.0
        %620 = vmatpush2.msra.mxu0 0.0
        %621 = vmatprep.mubr.f32.mxu0 0.0
        %622 = vmatmul.mubr.f32.gmra.mxu0 %v229
        %v623 = vpop.f32.mrf.mxu0
        %v624 = vadd.f32 0.0, %v623
        %v625 = vpop.f32.mrf.mxu0
        %626 = vmatprep.mubr.f32.mxu0 0.0
        %627 = vmatmul.mubr.f32.gmra.mxu0 %v232
        %v628 = vpop.f32.mrf.mxu0
        %v629 = vadd.f32 0.0, %v628
        %v630 = vpop.f32.mrf.mxu0
        %631 = vdwg.mxu0
        %v633 = vsel %vm227, %v624, 0
        %v636 = vsel %vm227, %v629, 0
        %638 = vmatprep.subr.mxu0 0.0
        %639 = vmatpush1.msra.mxu0 0.0
        %640 = vmatprep.subr.mxu0 0.0
        %641 = vmatpush1.msra.mxu0 0.0
        %642 = vmatprep.subr.mxu0 0.0
        %643 = vmatpush1.msra.mxu0 0.0
        %644 = vmatprep.subr.mxu0 0.0
        %645 = vmatpush1.msra.mxu0 0.0
        %646 = vmatprep.subr.mxu0 0.0
        %647 = vmatpush1.msra.mxu0 0.0
        %648 = vmatprep.subr.mxu0 0.0
        %649 = vmatpush1.msra.mxu0 0.0
        %650 = vmatprep.subr.mxu0 0.0
        %651 = vmatpush1.msra.mxu0 0.0
        %652 = vmatprep.subr.mxu0 0.0
        %653 = vmatpush1.msra.mxu0 0.0
        %654 = vmatprep.subr.mxu0 0.0
        %655 = vmatpush1.msra.mxu0 0.0
        %656 = vmatprep.subr.mxu0 0.0
        %657 = vmatpush1.msra.mxu0 0.0
        %658 = vmatprep.subr.mxu0 0.0
        %659 = vmatpush1.msra.mxu0 0.0
        %660 = vmatprep.subr.mxu0 0.0
        %661 = vmatpush1.msra.mxu0 0.0
        %662 = vmatprep.subr.mxu0 0.0
        %663 = vmatpush1.msra.mxu0 0.0
        %664 = vmatprep.subr.mxu0 0.0
        %665 = vmatpush1.msra.mxu0 0.0
        %666 = vmatprep.subr.mxu0 0.0
        %667 = vmatpush1.msra.mxu0 %v224
        %668 = vmatprep.subr.mxu0 0.0
        %669 = vmatpush1.msra.mxu0 %v223
        %670 = vmatprep.subr.mxu0 0.0
        %671 = vmatpush2.msra.mxu0 0.0
        %672 = vmatprep.subr.mxu0 0.0
        %673 = vmatpush2.msra.mxu0 0.0
        %674 = vmatprep.subr.mxu0 0.0
        %675 = vmatpush2.msra.mxu0 0.0
        %676 = vmatprep.subr.mxu0 0.0
        %677 = vmatpush2.msra.mxu0 0.0
        %678 = vmatprep.subr.mxu0 0.0
        %679 = vmatpush2.msra.mxu0 0.0
        %680 = vmatprep.subr.mxu0 0.0
        %681 = vmatpush2.msra.mxu0 0.0
        %682 = vmatprep.subr.mxu0 0.0
        %683 = vmatpush2.msra.mxu0 0.0
        %684 = vmatprep.subr.mxu0 0.0
        %685 = vmatpush2.msra.mxu0 0.0
        %686 = vmatprep.subr.mxu0 0.0
        %687 = vmatpush2.msra.mxu0 0.0
        %688 = vmatprep.subr.mxu0 0.0
        %689 = vmatpush2.msra.mxu0 0.0
        %690 = vmatprep.subr.mxu0 0.0
        %691 = vmatpush2.msra.mxu0 0.0
        %692 = vmatprep.subr.mxu0 0.0
        %693 = vmatpush2.msra.mxu0 0.0
        %694 = vmatprep.subr.mxu0 0.0
        %695 = vmatpush2.msra.mxu0 0.0
        %696 = vmatprep.subr.mxu0 0.0
        %697 = vmatpush2.msra.mxu0 0.0
        %698 = vmatprep.subr.mxu0 0.0
        %699 = vmatpush2.msra.mxu0 0.0
        %700 = vmatprep.subr.mxu0 0.0
        %701 = vmatpush2.msra.mxu0 0.0
        %702 = vmatprep.mubr.f32.mxu0 0.0
        %703 = vmatmul.mubr.f32.gmra.mxu0 %v633
        %v704 = vpop.f32.mrf.mxu0
        %v705 = vadd.f32 0.0, %v704
        %v706 = vpop.f32.mrf.mxu0
        %707 = vmatprep.mubr.f32.mxu0 0.0
        %708 = vmatmul.mubr.f32.gmra.mxu0 %v636
        %v709 = vpop.f32.mrf.mxu0
        %v710 = vadd.f32 0.0, %v709
        %v711 = vpop.f32.mrf.mxu0
        %712 = vdwg.mxu0
        %s713 = scalar_lea.vmem %s218, 32 [#allocation8]
        %714 = vst.msk [vmem:[%s713] sm:$0xff] %vm227, %v705
        %715 = vst.msk [vmem:[%s713 + $0x8] sm:$0xff] %vm227, %v710
        %s716 = scalar_lea.vmem %s188, 48 [#allocation2]
        %v717 = vld [vmem:[%s716] sm:$0xff]
        %v718 = vld [vmem:[%s716 + $0x8] sm:$0xff]
        %719 = vmatprep.subr.mxu0 0.0
        %720 = vmatpush1.msra.mxu0 0.0
        %721 = vmatprep.subr.mxu0 0.0
        %722 = vmatpush1.msra.mxu0 0.0
        %723 = vmatprep.subr.mxu0 0.0
        %724 = vmatpush1.msra.mxu0 0.0
        %725 = vmatprep.subr.mxu0 0.0
        %726 = vmatpush1.msra.mxu0 0.0
        %727 = vmatprep.subr.mxu0 0.0
        %728 = vmatpush1.msra.mxu0 0.0
        %729 = vmatprep.subr.mxu0 0.0
        %730 = vmatpush1.msra.mxu0 0.0
        %731 = vmatprep.subr.mxu0 0.0
        %732 = vmatpush1.msra.mxu0 0.0
        %733 = vmatprep.subr.mxu0 0.0
        %734 = vmatpush1.msra.mxu0 0.0
        %735 = vmatprep.subr.mxu0 0.0
        %736 = vmatpush1.msra.mxu0 0.0
        %737 = vmatprep.subr.mxu0 0.0
        %738 = vmatpush1.msra.mxu0 0.0
        %739 = vmatprep.subr.mxu0 0.0
        %740 = vmatpush1.msra.mxu0 0.0
        %741 = vmatprep.subr.mxu0 0.0
        %742 = vmatpush1.msra.mxu0 0.0
        %743 = vmatprep.subr.mxu0 0.0
        %744 = vmatpush1.msra.mxu0 0.0
        %745 = vmatprep.subr.mxu0 0.0
        %746 = vmatpush1.msra.mxu0 0.0
        %747 = vmatprep.subr.mxu0 0.0
        %748 = vmatpush1.msra.mxu0 %v718
        %749 = vmatprep.subr.mxu0 0.0
        %750 = vmatpush1.msra.mxu0 %v717
        %751 = vmatprep.subr.mxu0 0.0
        %752 = vmatpush2.msra.mxu0 0.0
        %753 = vmatprep.subr.mxu0 0.0
        %754 = vmatpush2.msra.mxu0 0.0
        %755 = vmatprep.subr.mxu0 0.0
        %756 = vmatpush2.msra.mxu0 0.0
        %757 = vmatprep.subr.mxu0 0.0
        %758 = vmatpush2.msra.mxu0 0.0
        %759 = vmatprep.subr.mxu0 0.0
        %760 = vmatpush2.msra.mxu0 0.0
        %761 = vmatprep.subr.mxu0 0.0
        %762 = vmatpush2.msra.mxu0 0.0
        %763 = vmatprep.subr.mxu0 0.0
        %764 = vmatpush2.msra.mxu0 0.0
        %765 = vmatprep.subr.mxu0 0.0
        %766 = vmatpush2.msra.mxu0 0.0
        %767 = vmatprep.subr.mxu0 0.0
        %768 = vmatpush2.msra.mxu0 0.0
        %769 = vmatprep.subr.mxu0 0.0
        %770 = vmatpush2.msra.mxu0 0.0
        %771 = vmatprep.subr.mxu0 0.0
        %772 = vmatpush2.msra.mxu0 0.0
        %773 = vmatprep.subr.mxu0 0.0
        %774 = vmatpush2.msra.mxu0 0.0
        %775 = vmatprep.subr.mxu0 0.0
        %776 = vmatpush2.msra.mxu0 0.0
        %777 = vmatprep.subr.mxu0 0.0
        %778 = vmatpush2.msra.mxu0 0.0
        %779 = vmatprep.subr.mxu0 0.0
        %780 = vmatpush2.msra.mxu0 0.0
        %781 = vmatprep.subr.mxu0 0.0
        %782 = vmatpush2.msra.mxu0 0.0
        %783 = vmatprep.mubr.f32.mxu0 0.0
        %784 = vmatmul.mubr.f32.gmra.mxu0 %v229
        %v785 = vpop.f32.mrf.mxu0
        %v786 = vadd.f32 0.0, %v785
        %v787 = vpop.f32.mrf.mxu0
        %788 = vmatprep.mubr.f32.mxu0 0.0
        %789 = vmatmul.mubr.f32.gmra.mxu0 %v232
        %v790 = vpop.f32.mrf.mxu0
        %v791 = vadd.f32 0.0, %v790
        %v792 = vpop.f32.mrf.mxu0
        %793 = vdwg.mxu0
        %v795 = vsel %vm227, %v786, 0
        %v798 = vsel %vm227, %v791, 0
        %800 = vmatprep.subr.mxu0 0.0
        %801 = vmatpush1.msra.mxu0 0.0
        %802 = vmatprep.subr.mxu0 0.0
        %803 = vmatpush1.msra.mxu0 0.0
        %804 = vmatprep.subr.mxu0 0.0
        %805 = vmatpush1.msra.mxu0 0.0
        %806 = vmatprep.subr.mxu0 0.0
        %807 = vmatpush1.msra.mxu0 0.0
        %808 = vmatprep.subr.mxu0 0.0
        %809 = vmatpush1.msra.mxu0 0.0
        %810 = vmatprep.subr.mxu0 0.0
        %811 = vmatpush1.msra.mxu0 0.0
        %812 = vmatprep.subr.mxu0 0.0
        %813 = vmatpush1.msra.mxu0 0.0
        %814 = vmatprep.subr.mxu0 0.0
        %815 = vmatpush1.msra.mxu0 0.0
        %816 = vmatprep.subr.mxu0 0.0
        %817 = vmatpush1.msra.mxu0 0.0
        %818 = vmatprep.subr.mxu0 0.0
        %819 = vmatpush1.msra.mxu0 0.0
        %820 = vmatprep.subr.mxu0 0.0
        %821 = vmatpush1.msra.mxu0 0.0
        %822 = vmatprep.subr.mxu0 0.0
        %823 = vmatpush1.msra.mxu0 0.0
        %824 = vmatprep.subr.mxu0 0.0
        %825 = vmatpush1.msra.mxu0 0.0
        %826 = vmatprep.subr.mxu0 0.0
        %827 = vmatpush1.msra.mxu0 0.0
        %828 = vmatprep.subr.mxu0 0.0
        %829 = vmatpush1.msra.mxu0 %v224
        %830 = vmatprep.subr.mxu0 0.0
        %831 = vmatpush1.msra.mxu0 %v223
        %832 = vmatprep.subr.mxu0 0.0
        %833 = vmatpush2.msra.mxu0 0.0
        %834 = vmatprep.subr.mxu0 0.0
        %835 = vmatpush2.msra.mxu0 0.0
        %836 = vmatprep.subr.mxu0 0.0
        %837 = vmatpush2.msra.mxu0 0.0
        %838 = vmatprep.subr.mxu0 0.0
        %839 = vmatpush2.msra.mxu0 0.0
        %840 = vmatprep.subr.mxu0 0.0
        %841 = vmatpush2.msra.mxu0 0.0
        %842 = vmatprep.subr.mxu0 0.0
        %843 = vmatpush2.msra.mxu0 0.0
        %844 = vmatprep.subr.mxu0 0.0
        %845 = vmatpush2.msra.mxu0 0.0
        %846 = vmatprep.subr.mxu0 0.0
        %847 = vmatpush2.msra.mxu0 0.0
        %848 = vmatprep.subr.mxu0 0.0
        %849 = vmatpush2.msra.mxu0 0.0
        %850 = vmatprep.subr.mxu0 0.0
        %851 = vmatpush2.msra.mxu0 0.0
        %852 = vmatprep.subr.mxu0 0.0
        %853 = vmatpush2.msra.mxu0 0.0
        %854 = vmatprep.subr.mxu0 0.0
        %855 = vmatpush2.msra.mxu0 0.0
        %856 = vmatprep.subr.mxu0 0.0
        %857 = vmatpush2.msra.mxu0 0.0
        %858 = vmatprep.subr.mxu0 0.0
        %859 = vmatpush2.msra.mxu0 0.0
        %860 = vmatprep.subr.mxu0 0.0
        %861 = vmatpush2.msra.mxu0 0.0
        %862 = vmatprep.subr.mxu0 0.0
        %863 = vmatpush2.msra.mxu0 0.0
        %864 = vmatprep.mubr.f32.mxu0 0.0
        %865 = vmatmul.mubr.f32.gmra.mxu0 %v795
        %v866 = vpop.f32.mrf.mxu0
        %v867 = vadd.f32 0.0, %v866
        %v868 = vpop.f32.mrf.mxu0
        %869 = vmatprep.mubr.f32.mxu0 0.0
        %870 = vmatmul.mubr.f32.gmra.mxu0 %v798
        %v871 = vpop.f32.mrf.mxu0
        %v872 = vadd.f32 0.0, %v871
        %v873 = vpop.f32.mrf.mxu0
        %874 = vdwg.mxu0
        %s875 = scalar_lea.vmem %s218, 48 [#allocation8]
        %876 = vst.msk [vmem:[%s875] sm:$0xff] %vm227, %v867
        %877 = vst.msk [vmem:[%s875 + $0x8] sm:$0xff] %vm227, %v872
        %s878 = sand.u32 %s97, 1
        %s879 = scalar_lea.sflag [#allocation4], %s878
        %s880 = sand.u32 %s97, 1
        %s881 = smul.addr %s880, 64
        %s882 = scalar_lea.vmem [#allocation8], %s881
        // Predicated region
        $region45: #{tpu_custom_call.1} parent=31 // pred_check
          %p883 = pneg %p107
        $region46: #{tpu_custom_call.1} parent=31 // pred_check_branch
          %885 = sbr.rel (%p883) target = $region48
        $region47: #{tpu_custom_call.1} parent=31 // pred_region
          %s886 = smul.u32 4, %s21
          %s888 = ssub.s32 1024, 1024
          %889 = vsyncadd %s879, %s888
          %s890 = smul.addr %s886, 2
          %s891 = smul.addr %s890, 128
          %s892 = scalar_lea.hbm %s3, %s891
          %s893 = sshll.u32 %s882, 4
          %s894 = int_to_ptr.vmem [resolvable:$true] %s893
          %899 = dma.vmem_to_hbm [thread:$0]  %s894, 1024, %s892, %s879, 128, 128, 8
        $region48: #{tpu_custom_call.1} parent=31 // pred_fallthru
          _
      $region32: #{tpu_custom_call.1} parent=5 // pred_fallthru
        _
      %p900 = scmp.le.s32.totalorder 2, %s16
      // Predicated region
      $region49: #{tpu_custom_call.1} parent=5 // pred_check
        %p901 = pneg %p900
      $region50: #{tpu_custom_call.1} parent=5 // pred_check_branch
        %903 = sbr.rel (%p901) target = $region52
      $region51: #{tpu_custom_call.1} parent=5 // pred_region
        %s904 = ssub.s32 %s16, 2
        // Predicated region
        $region53: #{tpu_custom_call.1} parent=51 // pred_check
          %p905 = pneg %p113
        $region54: #{tpu_custom_call.1} parent=51 // pred_check_branch
          %907 = sbr.rel (%p905) target = $region56
        $region55: #{tpu_custom_call.1} parent=51 // pred_region
          %s908 = sand.u32 %s98, 1
          %s909 = scalar_lea.sflag [#allocation4], %s908
          %s910 = sand.u32 %s98, 1
          %s911 = smul.addr %s910, 64
          %s912 = scalar_lea.vmem [#allocation8], %s911
          %913 = dma.done %s909, 1024
        $region56: #{tpu_custom_call.1} parent=51 // pred_fallthru
          _
      $region52: #{tpu_custom_call.1} parent=5 // pred_fallthru
        _
    $region6: #{tpu_custom_call.1} parent=1 // loop_footer
      %s20 = sadd.s32 1, %s16
    $region7: #{tpu_custom_call.1} parent=1 // loop_footer_branch
      %15 = sbr.rel target = $region3
    $region8: #{tpu_custom_call.1} parent=1 // loop_exit
      _
    %914 = vsyncpa [#allocation3], 1
    %s915 = scalar_lea.sflag [#allocation3], 1
    %916 = vsyncpa %s915, 1
    %917 = vsyncpa [#allocation6], 1
    %918 = vsyncpa [#allocation4], 1
    %s919 = scalar_lea.sflag [#allocation4], 1
    %920 = vsyncpa %s919, 1

</llo_original>
